<compile_context>
chip_gen: v7x
topology: tpu7x:2x2x1
jax: 0.10.0
libtpu: 0.0.40
codegen_flags: <defaults>
</compile_context>

<pallas_src>
import functools

import jax
import jax.numpy as jnp
from jax import lax
from jax.experimental import pallas as pl
from jax.experimental.pallas import tpu as pltpu


def _divkl_kernel(x_ref, o_ref, *, ng, b_total, tb):
    """Per-tile partial of sum_{b, i<j, d} p_i (logp_i - logp_j).

    x_ref: (ng, TB, D) block in VMEM.  o_ref: (8, 128) f32 block in VMEM; the
    whole block is filled with the tile's partial sum (unmasked lane-dense
    store); the wrapper reads element [0, 0] of each block.
    """
    d = x_ref.shape[-1]

    acc_row = jnp.zeros((tb, 1), jnp.float32)       # per-row partial (deferred reduce)
    cum_p = jnp.zeros((tb, d), jnp.float32)         # running sum_{i'<i} p_{i'}

    for i in range(ng):                             # ng is small & static -> unrolled
        xi = x_ref[i].astype(jnp.float32)           # (TB, D), dense (sublane, lane)
        m = jnp.max(xi, axis=-1, keepdims=True)
        z = xi - m
        e = jnp.exp(z)                              # single exp pass per element
        s = jnp.sum(e, axis=-1, keepdims=True)
        p = e * pl.reciprocal(s, approx=True)       # softmax (divide on EUP)
        logp = z - jnp.log(s)                       # log-softmax (no second exp)

        # Prefix-sum form of the pairwise loss: one lane reduce per group.
        acc_row = acc_row + jnp.sum(
            logp * (jnp.float32(ng - 1 - i) * p - cum_p), axis=-1, keepdims=True)
        if i < ng - 1:
            cum_p = cum_p + p

    # Mask padded rows of the (possibly partial) last batch tile.
    if b_total % tb != 0:
        row_ids = pl.program_id(0) * tb + lax.broadcasted_iota(
            jnp.int32, (tb, 1), 0)
        acc_row = jnp.where(row_ids < b_total, acc_row, jnp.float32(0.0))

    tile_partial = jnp.sum(acc_row)                 # single scalar reduce per tile
    o_ref[...] = jnp.broadcast_to(tile_partial, o_ref.shape)


def _choose_batch_tile(b, ng, d, itemsize):
    """Largest batch tile whose working set stays well under scoped VMEM."""
    # Double-buffered input block + ~6 live f32 (TB, D) temporaries in-kernel.
    bytes_per_row = 2 * ng * d * itemsize + 6 * d * 4
    budget = 20 * 1024 * 1024                       # headroom under the 32 MiB limit below
    tb = budget // max(bytes_per_row, 1)
    tb = int(max(8, min(512, (tb // 8) * 8)))       # multiple of 8 (sublane legal)
    if b <= tb:
        return b                                    # single tile: full-dim block is legal
    return tb


def div_kl(xs, *, add_global_group=False, batch_tile=None):
    """Pallas implementation of DivKL.forward. xs: (B, K, D) float array."""
    b, k, d = xs.shape
    ng = k - 1 if add_global_group else k
    if ng == 1:
        return jnp.float32(0.0)
    assert ng > 1, "No. of groups should larger than one"

    # Drop the unused global group before any DMA and put groups on the leading
    # axis so each group is a dense (TB, D) slab inside the kernel
    # (layout plumbing only, no compute hoisted into the wrapper).
    x = jnp.transpose(xs[:, :ng, :], (1, 0, 2))     # (ng, B, D)

    tb = batch_tile if batch_tile is not None else _choose_batch_tile(
        b, ng, d, xs.dtype.itemsize)
    tb = min(tb, b)
    nb = pl.cdiv(b, tb)

    partial_blocks = pl.pallas_call(
        functools.partial(_divkl_kernel, ng=ng, b_total=b, tb=tb),
        out_shape=jax.ShapeDtypeStruct((nb * 8, 128), jnp.float32),
        grid=(nb,),
        in_specs=[pl.BlockSpec((ng, tb, d), lambda i: (0, i, 0))],
        out_specs=pl.BlockSpec((8, 128), lambda i: (i, 0)),
        compiler_params=pltpu.CompilerParams(
            dimension_semantics=("parallel",),       # shards tiles across TCs on v7x
            vmem_limit_bytes=32 * 1024 * 1024,
        ),
    )(x)

    partials = partial_blocks.reshape(nb, 8, 128)[:, 0, 0]
    # loss = (sum_{i<j} -KL_ij averaged over batch) / (ng - 1)
    return -jnp.sum(partials) / jnp.float32(b * (ng - 1))


def _div_kl_ref(xs, *, add_global_group=False):
    """Pure-JAX reference mirroring the PyTorch module."""
    _, k, _ = xs.shape
    ng = k - 1 if add_global_group else k
    if ng == 1:
        return jnp.float32(0.0)
    x = xs.astype(jnp.float32)
    loss_div = 0.0
    for i in range(ng):
        for j in range(i + 1, ng):
            p = jax.nn.softmax(x[:, i, :], axis=-1)
            q = jax.nn.softmax(x[:, j, :], axis=-1)
            kl = jnp.mean(jnp.sum(p * jnp.log(p / q), axis=-1), axis=0)
            loss_div = loss_div - kl
    return loss_div / jnp.float32(ng - 1)


if __name__ == "__main__":
    # Small shapes consistent with the forward: xs of shape (batch, groups, hidden).
    B, K, D = 20, 4, 128
    key = jax.random.PRNGKey(0)
    xs = jax.random.normal(key, (B, K, D), dtype=jnp.float32)

    # Tolerances are loosened slightly because the kernel uses the approximate
    # EUP reciprocal (pl.reciprocal(..., approx=True)) in the softmax.
    tol = dict(rtol=2e-2, atol=1e-3)

    # Multi-tile path (grid over batch, masked partial last tile), ng = K = 4.
    loss_tiled = jax.block_until_ready(
        div_kl(xs, add_global_group=False, batch_tile=8))
    ref = _div_kl_ref(xs, add_global_group=False)
    assert jnp.allclose(loss_tiled, ref, **tol), (loss_tiled, ref)

    # Default (single-tile) path, ng = K = 4.
    loss = jax.block_until_ready(div_kl(xs, add_global_group=False))
    assert jnp.allclose(loss, ref, **tol), (loss, ref)

    # add_global_group=True path (ng = K - 1 = 3; last group never DMA'd).
    loss_g = jax.block_until_ready(div_kl(xs, add_global_group=True))
    ref_g = _div_kl_ref(xs, add_global_group=True)
    assert jnp.allclose(loss_g, ref_g, **tol), (loss_g, ref_g)

    # ng == 1 early-return path (no kernel launch).
    xs2 = jax.random.normal(jax.random.PRNGKey(1), (B, 2, D), dtype=jnp.float32)
    zero = div_kl(xs2, add_global_group=True)
    assert jnp.allclose(zero, 0.0), zero

    print("KERNEL_OK")
</pallas_src>

<mosaic_0001>
module attributes {stable_mosaic.version = 11 : i64} {
  func.func @_divkl_kernel(%arg0: i32, %arg1: memref<4x8x128xf32, #tpu.memory_space<vmem>>, %arg2: memref<8x128xf32, #tpu.memory_space<vmem>>) attributes {dimension_semantics = [#tpu.dimension_semantics<parallel>], iteration_bounds = array<i64: 3>, scalar_prefetch = 0 : i64, scratch_operands = 0 : i64, tpu.core_type = #tpu.core_type<tc>, window_params = [{transform_indices = @transform_0, window_bounds = array<i64: 4, 8, 128>}, {transform_indices = @transform_1, window_bounds = array<i64: 8, 128>}]} {
    %cst = arith.constant 0.000000e+00 : f32
    %0 = vector.broadcast %cst : f32 to vector<8x1xf32>
    %cst_0 = arith.constant 0.000000e+00 : f32
    %1 = vector.broadcast %cst_0 : f32 to vector<8x128xf32>
    %c0 = arith.constant 0 : index
    %c0_1 = arith.constant 0 : index
    %c0_2 = arith.constant 0 : index
    %2 = vector.load %arg1[%c0, %c0_1, %c0_2] : memref<4x8x128xf32, #tpu.memory_space<vmem>>, vector<1x8x128xf32>
    %3 = vector.shape_cast %2 : vector<1x8x128xf32> to vector<8x128xf32>
    %cst_3 = arith.constant dense<0xFF800000> : vector<8xf32>
    %4 = vector.multi_reduction <maximumf>, %3, %cst_3 [1] : vector<8x128xf32> to vector<8xf32>
    %5 = vector.shape_cast %4 : vector<8xf32> to vector<8x1xf32>
    %6 = vector.broadcast %5 : vector<8x1xf32> to vector<8x128xf32>
    %7 = arith.subf %3, %6 : vector<8x128xf32>
    %8 = math.exp %7 : vector<8x128xf32>
    %cst_4 = arith.constant dense<0.000000e+00> : vector<8xf32>
    %9 = vector.multi_reduction <add>, %8, %cst_4 [1] : vector<8x128xf32> to vector<8xf32>
    %10 = vector.shape_cast %9 : vector<8xf32> to vector<8x1xf32>
    %11 = tpu.reciprocal %10 {approx = true} : vector<8x1xf32> -> vector<8x1xf32>
    %12 = vector.broadcast %11 : vector<8x1xf32> to vector<8x128xf32>
    %13 = arith.mulf %8, %12 : vector<8x128xf32>
    %14 = math.log %10 : vector<8x1xf32>
    %15 = vector.broadcast %14 : vector<8x1xf32> to vector<8x128xf32>
    %16 = arith.subf %7, %15 : vector<8x128xf32>
    %cst_5 = arith.constant 3.000000e+00 : f32
    %17 = vector.broadcast %cst_5 : f32 to vector<8x128xf32>
    %18 = arith.mulf %17, %13 : vector<8x128xf32>
    %19 = arith.subf %18, %1 : vector<8x128xf32>
    %20 = arith.mulf %16, %19 : vector<8x128xf32>
    %cst_6 = arith.constant dense<0.000000e+00> : vector<8xf32>
    %21 = vector.multi_reduction <add>, %20, %cst_6 [1] : vector<8x128xf32> to vector<8xf32>
    %22 = vector.shape_cast %21 : vector<8xf32> to vector<8x1xf32>
    %23 = arith.addf %0, %22 : vector<8x1xf32>
    %24 = arith.addf %1, %13 : vector<8x128xf32>
    %c1 = arith.constant 1 : index
    %c0_7 = arith.constant 0 : index
    %c0_8 = arith.constant 0 : index
    %25 = vector.load %arg1[%c1, %c0_7, %c0_8] : memref<4x8x128xf32, #tpu.memory_space<vmem>>, vector<1x8x128xf32>
    %26 = vector.shape_cast %25 : vector<1x8x128xf32> to vector<8x128xf32>
    %cst_9 = arith.constant dense<0xFF800000> : vector<8xf32>
    %27 = vector.multi_reduction <maximumf>, %26, %cst_9 [1] : vector<8x128xf32> to vector<8xf32>
    %28 = vector.shape_cast %27 : vector<8xf32> to vector<8x1xf32>
    %29 = vector.broadcast %28 : vector<8x1xf32> to vector<8x128xf32>
    %30 = arith.subf %26, %29 : vector<8x128xf32>
    %31 = math.exp %30 : vector<8x128xf32>
    %cst_10 = arith.constant dense<0.000000e+00> : vector<8xf32>
    %32 = vector.multi_reduction <add>, %31, %cst_10 [1] : vector<8x128xf32> to vector<8xf32>
    %33 = vector.shape_cast %32 : vector<8xf32> to vector<8x1xf32>
    %34 = tpu.reciprocal %33 {approx = true} : vector<8x1xf32> -> vector<8x1xf32>
    %35 = vector.broadcast %34 : vector<8x1xf32> to vector<8x128xf32>
    %36 = arith.mulf %31, %35 : vector<8x128xf32>
    %37 = math.log %33 : vector<8x1xf32>
    %38 = vector.broadcast %37 : vector<8x1xf32> to vector<8x128xf32>
    %39 = arith.subf %30, %38 : vector<8x128xf32>
    %cst_11 = arith.constant 2.000000e+00 : f32
    %40 = vector.broadcast %cst_11 : f32 to vector<8x128xf32>
    %41 = arith.mulf %40, %36 : vector<8x128xf32>
    %42 = arith.subf %41, %24 : vector<8x128xf32>
    %43 = arith.mulf %39, %42 : vector<8x128xf32>
    %cst_12 = arith.constant dense<0.000000e+00> : vector<8xf32>
    %44 = vector.multi_reduction <add>, %43, %cst_12 [1] : vector<8x128xf32> to vector<8xf32>
    %45 = vector.shape_cast %44 : vector<8xf32> to vector<8x1xf32>
    %46 = arith.addf %23, %45 : vector<8x1xf32>
    %47 = arith.addf %24, %36 : vector<8x128xf32>
    %c2 = arith.constant 2 : index
    %c0_13 = arith.constant 0 : index
    %c0_14 = arith.constant 0 : index
    %48 = vector.load %arg1[%c2, %c0_13, %c0_14] : memref<4x8x128xf32, #tpu.memory_space<vmem>>, vector<1x8x128xf32>
    %49 = vector.shape_cast %48 : vector<1x8x128xf32> to vector<8x128xf32>
    %cst_15 = arith.constant dense<0xFF800000> : vector<8xf32>
    %50 = vector.multi_reduction <maximumf>, %49, %cst_15 [1] : vector<8x128xf32> to vector<8xf32>
    %51 = vector.shape_cast %50 : vector<8xf32> to vector<8x1xf32>
    %52 = vector.broadcast %51 : vector<8x1xf32> to vector<8x128xf32>
    %53 = arith.subf %49, %52 : vector<8x128xf32>
    %54 = math.exp %53 : vector<8x128xf32>
    %cst_16 = arith.constant dense<0.000000e+00> : vector<8xf32>
    %55 = vector.multi_reduction <add>, %54, %cst_16 [1] : vector<8x128xf32> to vector<8xf32>
    %56 = vector.shape_cast %55 : vector<8xf32> to vector<8x1xf32>
    %57 = tpu.reciprocal %56 {approx = true} : vector<8x1xf32> -> vector<8x1xf32>
    %58 = vector.broadcast %57 : vector<8x1xf32> to vector<8x128xf32>
    %59 = arith.mulf %54, %58 : vector<8x128xf32>
    %60 = math.log %56 : vector<8x1xf32>
    %61 = vector.broadcast %60 : vector<8x1xf32> to vector<8x128xf32>
    %62 = arith.subf %53, %61 : vector<8x128xf32>
    %cst_17 = arith.constant 1.000000e+00 : f32
    %63 = vector.broadcast %cst_17 : f32 to vector<8x128xf32>
    %64 = arith.mulf %63, %59 : vector<8x128xf32>
    %65 = arith.subf %64, %47 : vector<8x128xf32>
    %66 = arith.mulf %62, %65 : vector<8x128xf32>
    %cst_18 = arith.constant dense<0.000000e+00> : vector<8xf32>
    %67 = vector.multi_reduction <add>, %66, %cst_18 [1] : vector<8x128xf32> to vector<8xf32>
    %68 = vector.shape_cast %67 : vector<8xf32> to vector<8x1xf32>
    %69 = arith.addf %46, %68 : vector<8x1xf32>
    %70 = arith.addf %47, %59 : vector<8x128xf32>
    %c3 = arith.constant 3 : index
    %c0_19 = arith.constant 0 : index
    %c0_20 = arith.constant 0 : index
    %71 = vector.load %arg1[%c3, %c0_19, %c0_20] : memref<4x8x128xf32, #tpu.memory_space<vmem>>, vector<1x8x128xf32>
    %72 = vector.shape_cast %71 : vector<1x8x128xf32> to vector<8x128xf32>
    %cst_21 = arith.constant dense<0xFF800000> : vector<8xf32>
    %73 = vector.multi_reduction <maximumf>, %72, %cst_21 [1] : vector<8x128xf32> to vector<8xf32>
    %74 = vector.shape_cast %73 : vector<8xf32> to vector<8x1xf32>
    %75 = vector.broadcast %74 : vector<8x1xf32> to vector<8x128xf32>
    %76 = arith.subf %72, %75 : vector<8x128xf32>
    %77 = math.exp %76 : vector<8x128xf32>
    %cst_22 = arith.constant dense<0.000000e+00> : vector<8xf32>
    %78 = vector.multi_reduction <add>, %77, %cst_22 [1] : vector<8x128xf32> to vector<8xf32>
    %79 = vector.shape_cast %78 : vector<8xf32> to vector<8x1xf32>
    %80 = tpu.reciprocal %79 {approx = true} : vector<8x1xf32> -> vector<8x1xf32>
    %81 = vector.broadcast %80 : vector<8x1xf32> to vector<8x128xf32>
    %82 = arith.mulf %77, %81 : vector<8x128xf32>
    %83 = math.log %79 : vector<8x1xf32>
    %84 = vector.broadcast %83 : vector<8x1xf32> to vector<8x128xf32>
    %85 = arith.subf %76, %84 : vector<8x128xf32>
    %cst_23 = arith.constant 0.000000e+00 : f32
    %86 = vector.broadcast %cst_23 : f32 to vector<8x128xf32>
    %87 = arith.mulf %86, %82 : vector<8x128xf32>
    %88 = arith.subf %87, %70 : vector<8x128xf32>
    %89 = arith.mulf %85, %88 : vector<8x128xf32>
    %cst_24 = arith.constant dense<0.000000e+00> : vector<8xf32>
    %90 = vector.multi_reduction <add>, %89, %cst_24 [1] : vector<8x128xf32> to vector<8xf32>
    %91 = vector.shape_cast %90 : vector<8xf32> to vector<8x1xf32>
    %92 = arith.addf %69, %91 : vector<8x1xf32>
    %c8_i32 = arith.constant 8 : i32
    %93 = arith.muli %arg0, %c8_i32 : i32
    %94 = tpu.iota {dimensions = array<i32: 0>} : vector<8x1xi32>
    %95 = vector.broadcast %93 : i32 to vector<8x1xi32>
    %96 = arith.addi %95, %94 : vector<8x1xi32>
    %c20_i32 = arith.constant 20 : i32
    %97 = vector.broadcast %c20_i32 : i32 to vector<8x1xi32>
    %98 = arith.cmpi slt, %96, %97 : vector<8x1xi32>
    %cst_25 = arith.constant 0.000000e+00 : f32
    %99 = vector.broadcast %cst_25 : f32 to vector<8x1xf32>
    %100 = arith.select %98, %92, %99 : vector<8x1xi1>, vector<8x1xf32>
    %101 = vector.shape_cast %100 : vector<8x1xf32> to vector<1x8x1xf32>
    %cst_26 = arith.constant dense<0.000000e+00> : vector<1xf32>
    %102 = vector.multi_reduction <add>, %101, %cst_26 [1, 2] : vector<1x8x1xf32> to vector<1xf32>
    %103 = vector.shape_cast %102 : vector<1xf32> to vector<1x1x1xf32>
    %104 = vector.extract %103[0, 0, 0] : f32 from vector<1x1x1xf32>
    %105 = vector.broadcast %104 : f32 to vector<8x128xf32>
    %c0_27 = arith.constant 0 : index
    %c0_28 = arith.constant 0 : index
    %106 = vector.load %arg2[%c0_27, %c0_28] : memref<8x128xf32, #tpu.memory_space<vmem>>, vector<8x128xf32>
    tpu.vector_store %arg2[%c0_27, %c0_28], %105 {strides = array<i32>} : memref<8x128xf32, #tpu.memory_space<vmem>>, vector<8x128xf32>,
    return
  }
  func.func @transform_0(%arg0: i32) -> (i32, i32, i32) {
    %c0_i32 = arith.constant 0 : i32
    %c0_i32_0 = arith.constant 0 : i32
    %c0_i32_1 = arith.constant 0 : i32
    return %c0_i32, %arg0, %c0_i32_0 : i32, i32, i32
  }
  func.func @transform_1(%arg0: i32) -> (i32, i32) {
    %c0_i32 = arith.constant 0 : i32
    %c0_i32_0 = arith.constant 0 : i32
    return %arg0, %c0_i32 : i32, i32
  }
}

</mosaic_0001>

<llo_original>
// kernel: tpu_custom_call.1
$region0: #{tpu_custom_call.1}
  #allocation0 [shape = 'u32[]', space=smem, size = 0x4, offset = 0x4, fixed_abs, tag = 'smem constant byte address 0x4 - core index']
  #allocation1 [shape = 'u32[144,128]{1,0:T(1,128)}', space=vmem, size = 0x12000, scoped, tag = 'internal scratch']
  %s0 = inlined_call_operand.vmem [shape: f32[4,20,128], index: 0, kind: input, shape index: {}]
  %s1 = inlined_call_operand.hbm [shape: f32[24,128], index: 1, kind: output, shape index: {}]
  %s2 = sld [smem:[#allocation0]]
  $region75: #{tpu_custom_call.1} parent=0
    _
  %s4 = ssub.s32 1, %s2
  %s5 = scalar_select 0, %s4, %s2
  $region1: #{tpu_custom_call.1} parent=0
    #allocation2 [shape = 'u8[32768]{0}', space=vmem, size = 0x8000, scoped, tag = 'input window, operand 0']
    #allocation3 [shape = 'u8[8192]{0}', space=vmem, size = 0x2000, scoped, tag = 'output window, operand 0']
    #allocation4 [shape = 's32[2]{0}', space=sflag, size = 0x8, scoped, tag = 'scoped memory for tpu_custom_call.1']
    %6 = vsyncpa [#allocation4], 0
    %s7 = scalar_lea.sflag [#allocation4], 1
    %8 = vsyncpa %s7, 0
    loop: start=0, step=1, limit=5
    $region2: #{tpu_custom_call.1} parent=1 // loop_pre_header
      _
    $region3: #{tpu_custom_call.1} parent=1 // loop_header
      %s10 = sphi 0, %s14
      %p11 = scmp.ge.s32.totalorder %s10, 5
      %s20 = sphi 0, %s22
      %s23 = sphi 0, %s20
      %s24 = sphi 0, %s23
      %s40 = sphi 0, %s24
      %s46 = sphi 0, %s48
      %s49 = sphi 0, %s46
      %s50 = sphi 0, %s49
      %s66 = sphi 0, %s50
    $region4: #{tpu_custom_call.1} parent=1 // loop_header_branch
      %13 = sbr.rel (%p11) target = $region8
    $region5: #{tpu_custom_call.1} parent=1 // loop_body
      %s15 = ssub.s32 %s10, 1
      %s16 = ssub.s32 %s10, 2
      %s17 = sadd.s32 %s10, 1
      %s18 = ssub.s32 %s10, %s17
      %p19 = scmp.eq.s32.totalorder %s18, 0
      %s21 = sadd.s32 %s20, 1
      %s22 = scalar_select %p19, %s20, %s21
      %p25 = pneg %p19
      %p26 = scmp.eq.s32.totalorder %s10, 2
      %p27 = por %p25, %p26
      %p28 = scmp.ne.s32.totalorder %s20, %s23
      %p29 = scmp.eq.s32.totalorder %s10, 0
      %p30 = por %p28, %p29
      %p31 = scmp.ne.s32.totalorder %s20, %s23
      %p32 = scmp.eq.s32.totalorder %s15, 2
      %p33 = por %p31, %p32
      %p34 = scmp.ne.s32.totalorder %s23, %s24
      %p35 = scmp.eq.s32.totalorder %s15, 0
      %p36 = por %p34, %p35
      %p37 = scmp.ne.s32.totalorder %s23, %s24
      %p38 = scmp.eq.s32.totalorder %s16, 2
      %p39 = por %p37, %p38
      %p41 = scmp.ne.s32.totalorder %s24, %s40
      %p42 = scmp.eq.s32.totalorder %s16, 0
      %p43 = por %p41, %p42
      %s44 = ssub.s32 %s10, %s17
      %p45 = scmp.eq.s32.totalorder %s44, 0
      %s47 = sadd.s32 %s46, 1
      %s48 = scalar_select %p45, %s46, %s47
      %p51 = pneg %p45
      %p52 = scmp.eq.s32.totalorder %s10, 2
      %p53 = por %p51, %p52
      %p54 = scmp.ne.s32.totalorder %s46, %s49
      %p55 = scmp.eq.s32.totalorder %s10, 0
      %p56 = por %p54, %p55
      %p57 = scmp.ne.s32.totalorder %s46, %s49
      %p58 = scmp.eq.s32.totalorder %s15, 2
      %p59 = por %p57, %p58
      %p60 = scmp.ne.s32.totalorder %s49, %s50
      %p61 = scmp.eq.s32.totalorder %s15, 0
      %p62 = por %p60, %p61
      %p63 = scmp.ne.s32.totalorder %s49, %s50
      %p64 = scmp.eq.s32.totalorder %s16, 2
      %p65 = por %p63, %p64
      %p67 = scmp.ne.s32.totalorder %s50, %s66
      %p68 = scmp.eq.s32.totalorder %s16, 0
      %p69 = por %p67, %p68
      %p70 = scmp.le.s32.totalorder 1, %s10
      %p71 = scmp.lt.s32.totalorder %s10, 4
      %p72 = pnand %p70, %p71
      %p73 = pneg %p72
      // Predicated region
      $region9: #{tpu_custom_call.1} parent=5 // pred_check
        _
      $region10: #{tpu_custom_call.1} parent=5 // pred_check_branch
        %75 = sbr.rel (%p72) target = $region12
      $region11: #{tpu_custom_call.1} parent=5 // pred_region
        %s76 = ssub.s32 %s10, 1
      $region12: #{tpu_custom_call.1} parent=5 // pred_fallthru
        _
      %p77 = scmp.lt.s32.totalorder %s10, 3
      // Predicated region
      $region13: #{tpu_custom_call.1} parent=5 // pred_check
        %p78 = pneg %p77
      $region14: #{tpu_custom_call.1} parent=5 // pred_check_branch
        %80 = sbr.rel (%p78) target = $region16
      $region15: #{tpu_custom_call.1} parent=5 // pred_region
        // Predicated region
        $region17: #{tpu_custom_call.1} parent=15 // pred_check
          %p81 = pneg %p30
        $region18: #{tpu_custom_call.1} parent=15 // pred_check_branch
          %83 = sbr.rel (%p81) target = $region20
        $region19: #{tpu_custom_call.1} parent=15 // pred_region
          %s84 = sand.u32 %s20, 1
          %s85 = sand.u32 %s20, 1
          %s86 = smul.addr %s85, 32
          %s87 = scalar_lea.vmem [#allocation2], %s86
          %s88 = smul.addr %s10, 8
          %s89 = scalar_lea.vmem %s0, %s88
          // Predicated region
          $region21: #{tpu_custom_call.1} parent=19 // pred_check
            _
          $region22: #{tpu_custom_call.1} parent=19 // pred_check_branch
            %91 = sbr.rel (0) target = $region24
          $region23: #{tpu_custom_call.1} parent=19 // pred_region
            // Predicated region
            $region25: #{tpu_custom_call.1} parent=23 // pred_check
              _
            $region26: #{tpu_custom_call.1} parent=23 // pred_check_branch
              %93 = sbr.rel (0) target = $region28
            $region27: #{tpu_custom_call.1} parent=23 // pred_region
              // Predicated region
              $region40: #{tpu_custom_call.1} parent=27 // pred_check
                _
              $region41: #{tpu_custom_call.1} parent=27 // pred_check_branch
                %114 = sbr.rel (0) target = $region43
              $region42: #{tpu_custom_call.1} parent=27 // pred_region
                loop: start=0, step=1, limit=1
                $region44: #{tpu_custom_call.1} parent=42 // loop_pre_header
                  _
                $region45: #{tpu_custom_call.1} parent=42 // loop_header
                  %s116 = sphi 0, %s120
                  %p117 = scmp.ge.s32.totalorder %s116, 1
                  %s121 = sphi %s89, %s89
                  %s122 = sphi %s87, %s87
                $region46: #{tpu_custom_call.1} parent=42 // loop_header_branch
                  %119 = sbr.rel (%p117) target = $region50
                $region47: #{tpu_custom_call.1} parent=42 // loop_body
                  %v123 = vld [vmem:[%s121] sm:$0xff]
                  %124 = vst [vmem:[%s122] sm:$0xff] %v123
                  %v125 = vld [vmem:[%s121 + $0x18] sm:$0xff]
                  %126 = vst [vmem:[%s122 + $0x8] sm:$0xff] %v125
                  %v127 = vld [vmem:[%s121 + $0x30] sm:$0xff]
                  %128 = vst [vmem:[%s122 + $0x10] sm:$0xff] %v127
                  %v129 = vld [vmem:[%s121 + $0x48] sm:$0xff]
                  %130 = vst [vmem:[%s122 + $0x18] sm:$0xff] %v129
                $region48: #{tpu_custom_call.1} parent=42 // loop_footer
                  %s120 = sadd.s32 1, %s116
                $region49: #{tpu_custom_call.1} parent=42 // loop_footer_branch
                  %115 = sbr.rel target = $region45
                $region50: #{tpu_custom_call.1} parent=42 // loop_exit
                  _
              $region43: #{tpu_custom_call.1} parent=27 // pred_fallthru
                _
              // Predicated region
              $region51: #{tpu_custom_call.1} parent=27 // pred_check
                _
              $region52: #{tpu_custom_call.1} parent=27 // pred_check_branch
                %132 = sbr.rel target = $region54
              $region53: #{tpu_custom_call.1} parent=27 // pred_region
                _
              $region54: #{tpu_custom_call.1} parent=27 // pred_fallthru
                _
            $region28: #{tpu_custom_call.1} parent=23 // pred_fallthru
              _
            // Predicated region
            $region29: #{tpu_custom_call.1} parent=23 // pred_check
              _
            $region30: #{tpu_custom_call.1} parent=23 // pred_check_branch
              %95 = sbr.rel target = $region32
            $region31: #{tpu_custom_call.1} parent=23 // pred_region
              loop: start=0, step=1, limit=1
              $region33: #{tpu_custom_call.1} parent=31 // loop_pre_header
                _
              $region34: #{tpu_custom_call.1} parent=31 // loop_header
                %s98 = sphi 0, %s102
                %p99 = scmp.ge.s32.totalorder %s98, 1
                %s103 = sphi %s89, %s89
                %s104 = sphi %s87, %s87
              $region35: #{tpu_custom_call.1} parent=31 // loop_header_branch
                %101 = sbr.rel (%p99) target = $region39
              $region36: #{tpu_custom_call.1} parent=31 // loop_body
                %v105 = vld [vmem:[%s103] sm:$0xff]
                %106 = vst [vmem:[%s104] sm:$0xff] %v105
                %v107 = vld [vmem:[%s103 + $0x18] sm:$0xff]
                %108 = vst [vmem:[%s104 + $0x8] sm:$0xff] %v107
                %v109 = vld [vmem:[%s103 + $0x30] sm:$0xff]
                %110 = vst [vmem:[%s104 + $0x10] sm:$0xff] %v109
                %v111 = vld [vmem:[%s103 + $0x48] sm:$0xff]
                %112 = vst [vmem:[%s104 + $0x18] sm:$0xff] %v111
              $region37: #{tpu_custom_call.1} parent=31 // loop_footer
                %s102 = sadd.s32 1, %s98
              $region38: #{tpu_custom_call.1} parent=31 // loop_footer_branch
                %97 = sbr.rel target = $region34
              $region39: #{tpu_custom_call.1} parent=31 // loop_exit
                _
            $region32: #{tpu_custom_call.1} parent=23 // pred_fallthru
              _
          $region24: #{tpu_custom_call.1} parent=19 // pred_fallthru
            _
          %133 = vnop
        $region20: #{tpu_custom_call.1} parent=15 // pred_fallthru
          _
      $region16: #{tpu_custom_call.1} parent=5 // pred_fallthru
        _
      %p134 = scmp.le.s32.totalorder 1, %s10
      %p135 = scmp.lt.s32.totalorder %s10, 4
      %p136 = pnand %p134, %p135
      %p137 = pneg %p136
      // Predicated region
      $region55: #{tpu_custom_call.1} parent=5 // pred_check
        _
      $region56: #{tpu_custom_call.1} parent=5 // pred_check_branch
        %139 = sbr.rel (%p136) target = $region58
      $region57: #{tpu_custom_call.1} parent=5 // pred_region
        %s140 = ssub.s32 %s10, 1
        %s141 = sand.u32 %s23, 1
        %s142 = sand.u32 %s23, 1
        %s143 = smul.addr %s142, 32
        %s144 = scalar_lea.vmem [#allocation2], %s143
        // Predicated region
        $region59: #{tpu_custom_call.1} parent=57 // pred_check
          %p145 = pneg %p36
        $region60: #{tpu_custom_call.1} parent=57 // pred_check_branch
          %147 = sbr.rel (%p145) target = $region62
        $region61: #{tpu_custom_call.1} parent=57 // pred_region
          _
        $region62: #{tpu_custom_call.1} parent=57 // pred_fallthru
          _
        %s148 = sand.u32 %s23, 1
        %s149 = sand.u32 %s23, 1
        %s150 = smul.addr %s149, 32
        %s151 = scalar_lea.vmem [#allocation2], %s150
        %p152 = pneg %p36
        %p153 = pneg %p33
        %p154 = pneg %p62
        %p155 = pneg %p59
        %s156 = sand.u32 %s49, 1
        %s157 = scalar_lea.sflag [#allocation4], %s156
        %s158 = sand.u32 %s49, 1
        %s159 = smul.addr %s158, 8
        %s160 = scalar_lea.vmem [#allocation3], %s159
        %v161 = vld [vmem:[%s144] sm:$0xff]
        %162 = vmax.xlane.f32.xlu0 %v161
        %v163 = vpop.xlane.xlu0 %162
        %v164 = vsub.f32 %v161, %v163
        %v165 = vmul.f32 %v164, 1.442695
        %v166 = vpow.pop %v165
        %167 = vadd.xlane.f32.xlu0 %v166
        %v168 = vpop.xlane.xlu0 %167
        %v169 = vrcp.pop %v168
        %v170 = vmul.f32 %v166, %v169
        %v171 = vlog2.pop %v168
        %v172 = vmul.f32 %v171, 0.6931472
        %v173 = vsub.f32 %v164, %v172
        %v174 = vmul.f32 %v170, 3.0
        %v175 = vmul.f32 %v173, %v174
        %176 = vadd.xlane.f32.xlu0 %v175
        %v177 = vpop.xlane.xlu0 %176
        %v178 = vadd.f32 %v177, 0.0
        %v179 = vadd.f32 %v170, 0.0
        %s180 = scalar_lea.vmem %s144, 8 [#allocation2]
        %v181 = vld [vmem:[%s180] sm:$0xff]
        %182 = vmax.xlane.f32.xlu0 %v181
        %v183 = vpop.xlane.xlu0 %182
        %v184 = vsub.f32 %v181, %v183
        %v185 = vmul.f32 %v184, 1.442695
        %v186 = vpow.pop %v185
        %187 = vadd.xlane.f32.xlu0 %v186
        %v188 = vpop.xlane.xlu0 %187
        %v189 = vrcp.pop %v188
        %v190 = vmul.f32 %v186, %v189
        %v191 = vlog2.pop %v188
        %v192 = vmul.f32 %v191, 0.6931472
        %v193 = vsub.f32 %v184, %v192
        %v194 = vmul.f32 %v190, 2.0
        %v195 = vsub.f32 %v194, %v179
        %v196 = vmul.f32 %v193, %v195
        %197 = vadd.xlane.f32.xlu0 %v196
        %v198 = vpop.xlane.xlu0 %197
        %v199 = vadd.f32 %v178, %v198
        %v200 = vadd.f32 %v179, %v190
        %s201 = scalar_lea.vmem %s144, 16 [#allocation2]
        %v202 = vld [vmem:[%s201] sm:$0xff]
        %203 = vmax.xlane.f32.xlu0 %v202
        %v204 = vpop.xlane.xlu0 %203
        %v205 = vsub.f32 %v202, %v204
        %v206 = vmul.f32 %v205, 1.442695
        %v207 = vpow.pop %v206
        %208 = vadd.xlane.f32.xlu0 %v207
        %v209 = vpop.xlane.xlu0 %208
        %v210 = vrcp.pop %v209
        %v211 = vmul.f32 %v207, %v210
        %v212 = vlog2.pop %v209
        %v213 = vmul.f32 %v212, 0.6931472
        %v214 = vsub.f32 %v205, %v213
        %v215 = vsub.f32 %v211, %v200
        %v216 = vmul.f32 %v214, %v215
        %217 = vadd.xlane.f32.xlu0 %v216
        %v218 = vpop.xlane.xlu0 %217
        %v219 = vadd.f32 %v199, %v218
        %v220 = vadd.f32 %v200, %v211
        %s221 = scalar_lea.vmem %s144, 24 [#allocation2]
        %v222 = vld [vmem:[%s221] sm:$0xff]
        %223 = vmax.xlane.f32.xlu0 %v222
        %v224 = vpop.xlane.xlu0 %223
        %v225 = vsub.f32 %v222, %v224
        %v226 = vmul.f32 %v225, 1.442695
        %v227 = vpow.pop %v226
        %228 = vadd.xlane.f32.xlu0 %v227
        %v229 = vpop.xlane.xlu0 %228
        %v230 = vrcp.pop %v229
        %v231 = vmul.f32 %v227, %v230
        %v232 = vlog2.pop %v229
        %v233 = vmul.f32 %v232, 0.6931472
        %v234 = vsub.f32 %v225, %v233
        %v235 = vmul.f32 %v231, 0.0
        %v236 = vsub.f32 %v235, %v220
        %v237 = vmul.f32 %v234, %v236
        %238 = vadd.xlane.f32.xlu0 %v237
        %v239 = vpop.xlane.xlu0 %238
        %v240 = vadd.f32 %v219, %v239
        %s241 = smul.u32 %s15, 8
        %v242 = vlaneseq
        %v243 = vshrl.u32 %v242, 7
        %v244 = vstv %s241
        %v245 = vadd.s32 %v244, %v243
        %vm246 = vcmp.lt.s32.totalorder %v245, 20
        %v247 = vsel %vm246, %v240, 0.0
        %vm248 = vcmask 7168
        %v249 = vsel %vm248, %v247, 0.0
        %250 = vadd.xlane.f32.xlu0 %v249
        %v251 = vpop.xlane.xlu0 %250
        %v252 = vrot.slane %v251, 4
        %v253 = vadd.f32 %v251, %v252
        %v254 = vrot.slane %v253, 2
        %v255 = vadd.f32 %v253, %v254
        %v256 = vrot.slane %v255, 1
        %v257 = vadd.f32 %v255, %v256
        %s258 = vtos %v257
        %v259 = vstv %s258
        %260 = vst [vmem:[%s160] sm:$0xff] %v259
        %s261 = sand.u32 %s49, 1
        %s262 = scalar_lea.sflag [#allocation4], %s261
        %s263 = sand.u32 %s49, 1
        %s264 = smul.addr %s263, 8
        %s265 = scalar_lea.vmem [#allocation3], %s264
        // Predicated region
        $region63: #{tpu_custom_call.1} parent=57 // pred_check
          %p266 = pneg %p59
        $region64: #{tpu_custom_call.1} parent=57 // pred_check_branch
          %268 = sbr.rel (%p266) target = $region66
        $region65: #{tpu_custom_call.1} parent=57 // pred_region
          %s270 = ssub.s32 128, 128
          %271 = vsyncadd %s262, %s270
          %s272 = smul.addr %s15, 128
          %s273 = scalar_lea.hbm %s1, %s272
          %s275 = sshll.u32 %s265, 4
          %s276 = int_to_ptr.vmem [resolvable:$true] %s275
          %278 = dma.vmem_to_hbm [thread:$0]  %s276, 128, %s273, %s262
        $region66: #{tpu_custom_call.1} parent=57 // pred_fallthru
          _
      $region58: #{tpu_custom_call.1} parent=5 // pred_fallthru
        _
      %p279 = scmp.le.s32.totalorder 2, %s10
      // Predicated region
      $region67: #{tpu_custom_call.1} parent=5 // pred_check
        %p280 = pneg %p279
      $region68: #{tpu_custom_call.1} parent=5 // pred_check_branch
        %282 = sbr.rel (%p280) target = $region70
      $region69: #{tpu_custom_call.1} parent=5 // pred_region
        %s283 = ssub.s32 %s10, 2
        // Predicated region
        $region71: #{tpu_custom_call.1} parent=69 // pred_check
          %p284 = pneg %p65
        $region72: #{tpu_custom_call.1} parent=69 // pred_check_branch
          %286 = sbr.rel (%p284) target = $region74
        $region73: #{tpu_custom_call.1} parent=69 // pred_region
          %s287 = sand.u32 %s50, 1
          %s288 = scalar_lea.sflag [#allocation4], %s287
          %s289 = sand.u32 %s50, 1
          %s290 = smul.addr %s289, 8
          %s291 = scalar_lea.vmem [#allocation3], %s290
          %292 = dma.done %s288, 128
        $region74: #{tpu_custom_call.1} parent=69 // pred_fallthru
          _
      $region70: #{tpu_custom_call.1} parent=5 // pred_fallthru
        _
    $region6: #{tpu_custom_call.1} parent=1 // loop_footer
      %s14 = sadd.s32 1, %s10
    $region7: #{tpu_custom_call.1} parent=1 // loop_footer_branch
      %9 = sbr.rel target = $region3
    $region8: #{tpu_custom_call.1} parent=1 // loop_exit
      _
    %293 = vsyncpa [#allocation4], 1
    %s294 = scalar_lea.sflag [#allocation4], 1
    %295 = vsyncpa %s294, 1

</llo_original>
